<compile_context>
chip_gen: v7x
topology: tpu7x:2x2x1
jax: 0.10.0
libtpu: 0.0.40
codegen_flags: <defaults>
</compile_context>

<pallas_src>
import functools

import jax
import jax.numpy as jnp
from jax.experimental import pallas as pl
from jax.experimental.pallas import tpu as pltpu

HIDDEN = 16   # fixed by the module: nn.Linear(input, 16), nn.Linear(16, 16)
LANE = 128    # TPU lane width


def _round_up(x, m):
    return ((x + m - 1) // m) * m


def _cdiv(a, b):
    return (a + b - 1) // b


def _slab_layout(n_out):
    """Row offsets of each parameter inside the packed [rows, 128] slab.

    Everything is stored transposed (feature-major); every region starts on a 16-row
    boundary (one bf16 sublane tile) so in-kernel slices are zero-cost views.
    """
    out_rows = _round_up(1 + n_out, 8)   # value row + policy rows, sublane aligned
    hr = _round_up(HIDDEN, 16)
    orr = _round_up(out_rows, 16)
    w1 = 0                               # W1^T      [HIDDEN, d_in]
    w2 = hr                              # W2^T      [HIDDEN, HIDDEN]
    wh = 2 * hr                          # W_heads^T [out_rows, HIDDEN]  (row 0 = value)
    b1 = 2 * hr + orr                    # b1 column [HIDDEN, 1]
    b2 = b1 + hr                         # b2 column [HIDDEN, 1]
    bh = b2 + hr                         # head-bias column [out_rows, 1]
    rows = bh + orr
    return dict(out_rows=out_rows, w1=w1, w2=w2, wh=wh, b1=b1, b2=b2, bh=bh, rows=rows)


def _a2c_kernel(x_ref, p_ref, out_ref, *, d_in, n_out):
    """One batch tile, transposed (feature-major) layout.

    x_ref:   (tile_b, d_in)      compute dtype (bf16 by default)
    p_ref:   (slab_rows, 128)    packed transposed weights/biases (see _slab_layout)
    out_ref: (out_rows, tile_b)  f32; row 0 = value, rows 1..n_out = softmax(policy)
    """
    H = HIDDEN
    lay = _slab_layout(n_out)
    out_rows = lay["out_rows"]

    x = x_ref[...]                                      # (tile_b, d_in)
    cdt = x.dtype

    w1t = p_ref[lay["w1"]:lay["w1"] + H, 0:d_in]        # (H, d_in)
    w2t = p_ref[lay["w2"]:lay["w2"] + H, 0:H]           # (H, H)
    wht = p_ref[lay["wh"]:lay["wh"] + out_rows, 0:H]    # (out_rows, H)
    b1 = p_ref[lay["b1"]:lay["b1"] + H, 0:1]            # (H, 1)
    b2 = p_ref[lay["b2"]:lay["b2"] + H, 0:1]            # (H, 1)
    bh = p_ref[lay["bh"]:lay["bh"] + out_rows, 0:1]     # (out_rows, 1)

    # h1^T = relu(W1^T @ x^T + b1): contract d_in of BOTH operands (A @ B^T pattern),
    # so x is consumed transposed without any explicit in-kernel transpose.
    nt = (((1,), (1,)), ((), ()))
    h1 = jax.lax.dot_general(w1t, x, nt, preferred_element_type=jnp.float32)
    h1 = jnp.maximum(h1 + b1, 0.0).astype(cdt)          # (H, tile_b)

    # h2^T = relu(W2^T @ h1^T + b2)
    h2 = jnp.dot(w2t, h1, preferred_element_type=jnp.float32)
    h2 = jnp.maximum(h2 + b2, 0.0).astype(cdt)          # (H, tile_b)

    # Fused heads: row 0 = value, rows 1..n_out = policy logits (f32 accumulation).
    heads = jnp.dot(wht, h2, preferred_element_type=jnp.float32) + bh  # (out_rows, tile_b)

    row = jax.lax.broadcasted_iota(jnp.int32, heads.shape, 0)
    is_policy = jnp.logical_and(row >= 1, row <= n_out)

    # Numerically stable softmax over the policy rows only (padded rows -> exp == 0).
    logits = jnp.where(is_policy, heads, jnp.float32(-1e30))
    m = jnp.max(logits, axis=0, keepdims=True)          # (1, tile_b)
    e = jnp.exp(logits - m)
    s = jnp.sum(e, axis=0, keepdims=True)
    inv = pl.reciprocal(s, approx=True)                 # EUP slot (co-issues with VPU)
    inv = inv * (2.0 - s * inv)                         # one Newton step -> ~f32 exact

    # Lane-dense store: row 0 keeps the raw value head, other rows get softmax probs.
    out_ref[...] = jnp.where(row == 0, heads, e * inv)


def pack_params(p, d_in, n_out):
    """Pack the 8 small tensors (transposed) into one lane-padded f32 slab."""
    lay = _slab_layout(n_out)
    H = HIDDEN
    slab = jnp.zeros((lay["rows"], LANE), jnp.float32)
    slab = slab.at[lay["w1"]:lay["w1"] + H, 0:d_in].set(p["w1"].T)
    slab = slab.at[lay["w2"]:lay["w2"] + H, 0:H].set(p["w2"].T)
    slab = slab.at[lay["wh"]:lay["wh"] + 1, 0:H].set(p["wv"].T)
    slab = slab.at[lay["wh"] + 1:lay["wh"] + 1 + n_out, 0:H].set(p["wp"].T)
    slab = slab.at[lay["b1"]:lay["b1"] + H, 0:1].set(p["b1"].reshape(H, 1))
    slab = slab.at[lay["b2"]:lay["b2"] + H, 0:1].set(p["b2"].reshape(H, 1))
    slab = slab.at[lay["bh"]:lay["bh"] + 1, 0:1].set(p["bv"].reshape(1, 1))
    slab = slab.at[lay["bh"] + 1:lay["bh"] + 1 + n_out, 0:1].set(p["bp"].reshape(n_out, 1))
    return slab


def a2c_forward(x, param_slab, n_out, *, target_tile_b=4096,
                compute_dtype=jnp.bfloat16):
    """x: [B, d_in] f32.  param_slab: packed f32 weights (see pack_params).

    Returns (value [B, 1], policy [B, n_out]) matching A2CNet.forward.
    """
    B, d_in = x.shape
    lay = _slab_layout(n_out)
    out_rows = lay["out_rows"]
    assert d_in <= LANE and HIDDEN <= LANE
    assert param_slab.shape == (lay["rows"], LANE)

    # Balanced, 128-aligned batch tiles: big batches get big tiles (amortize the
    # ~0.35us/grid-step overhead); padding waste is always < 1 tile.
    n_tiles = max(1, _cdiv(B, target_tile_b))
    tile_b = _round_up(_cdiv(B, n_tiles), LANE)
    b_pad = tile_b * n_tiles

    xb = x.astype(compute_dtype)
    if b_pad != B:
        xb = jnp.pad(xb, ((0, b_pad - B), (0, 0)))
    slab = param_slab.astype(compute_dtype)

    kernel = functools.partial(_a2c_kernel, d_in=d_in, n_out=n_out)

    itemsize = jnp.dtype(compute_dtype).itemsize
    cost = pl.CostEstimate(
        flops=2 * b_pad * HIDDEN * (d_in + HIDDEN + out_rows),
        transcendentals=b_pad * out_rows,
        bytes_accessed=(b_pad * d_in + int(slab.size)) * itemsize + out_rows * b_pad * 4,
    )

    out = pl.pallas_call(
        kernel,
        out_shape=jax.ShapeDtypeStruct((out_rows, b_pad), jnp.float32),
        grid=(n_tiles,),
        in_specs=[
            # batch-tiled states; auto-pipelined (input DMA overlaps compute)
            pl.BlockSpec((tile_b, d_in), lambda i: (i, 0)),
            # constant block index -> fetched once, stays resident in VMEM
            pl.BlockSpec(slab.shape, lambda i: (0, 0)),
        ],
        # transposed, lane-dense output: batch on the lane axis -> unmasked stores
        # and ~16x less HBM writeback than a [b_pad, 128] f32 slab
        out_specs=pl.BlockSpec((out_rows, tile_b), lambda i: (0, i)),
        compiler_params=pltpu.CompilerParams(
            dimension_semantics=("parallel",)),   # megacore / v7x 2-TC sharding
        cost_estimate=cost,
    )(xb, slab)

    value = out[0, :B].reshape(B, 1)
    policy = jnp.transpose(out[1:1 + n_out, :B])
    return value, policy


def init_params(key, d_in, d_out):
    """Deterministic init mimicking nn.Linear: U(-1/sqrt(fan_in), 1/sqrt(fan_in)).

    Weights stored feature-last ([in, out]); equivalent to x @ W_pt.T + b.
    """
    def linear(key, fan_in, fan_out):
        kw, kb = jax.random.split(key)
        bound = 1.0 / jnp.sqrt(float(fan_in))
        w = jax.random.uniform(kw, (fan_in, fan_out), jnp.float32, -bound, bound)
        b = jax.random.uniform(kb, (1, fan_out), jnp.float32, -bound, bound)
        return w, b

    k1, k2, k3, k4 = jax.random.split(key, 4)
    w1, b1 = linear(k1, d_in, HIDDEN)
    w2, b2 = linear(k2, HIDDEN, HIDDEN)
    wv, bv = linear(k3, HIDDEN, 1)
    wp, bp = linear(k4, HIDDEN, d_out)
    return dict(w1=w1, b1=b1, w2=w2, b2=b2, wv=wv, bv=bv, wp=wp, bp=bp)


def a2c_reference(x, p):
    h1 = jnp.maximum(x @ p["w1"] + p["b1"], 0.0)
    h2 = jnp.maximum(h1 @ p["w2"] + p["b2"], 0.0)
    value = h2 @ p["wv"] + p["bv"]
    policy = jax.nn.softmax(h2 @ p["wp"] + p["bp"], axis=-1)
    return value, policy


if __name__ == "__main__":
    key = jax.random.PRNGKey(0)
    kx1, kx2, kp = jax.random.split(key, 3)

    d_in = 8         # observation dim (module's `input`)
    n_actions = 4    # number of actions (module's `output`)
    params = init_params(kp, d_in, n_actions)
    slab = pack_params(params, d_in, n_actions)

    # --- small batch, f32 compute: tight correctness check -----------------------
    x1 = jax.random.normal(kx1, (4, d_in), jnp.float32)
    v1, p1 = a2c_forward(x1, slab, n_actions, compute_dtype=jnp.float32)
    v1 = jax.block_until_ready(v1)
    p1 = jax.block_until_ready(p1)
    v1_ref, p1_ref = a2c_reference(x1, params)
    assert v1.shape == (4, 1) and p1.shape == (4, n_actions)
    assert jnp.allclose(v1, v1_ref, atol=1e-4, rtol=1e-4)
    assert jnp.allclose(p1, p1_ref, atol=1e-4, rtol=1e-4)
    assert jnp.allclose(jnp.sum(p1, axis=-1), 1.0, atol=1e-4)

    # --- larger ragged batch, bf16 compute, multi-step pipelined grid ------------
    # (B not a multiple of the tile, B > tile: exercises padding + grid pipelining)
    x2 = jax.random.normal(kx2, (1000, d_in), jnp.float32)
    v2, p2 = a2c_forward(x2, slab, n_actions, target_tile_b=256)
    v2 = jax.block_until_ready(v2)
    p2 = jax.block_until_ready(p2)
    v2_ref, p2_ref = a2c_reference(x2, params)
    assert v2.shape == (1000, 1) and p2.shape == (1000, n_actions)
    assert jnp.allclose(v2, v2_ref, atol=6e-2, rtol=6e-2)   # bf16 inputs -> loose tol
    assert jnp.allclose(p2, p2_ref, atol=3e-2)
    assert jnp.allclose(jnp.sum(p2, axis=-1), 1.0, atol=1e-3)

    print("KERNEL_OK")
</pallas_src>

<mosaic_0001>
module attributes {stable_mosaic.version = 11 : i64} {
  func.func @_a2c_kernel(%arg0: i32, %arg1: memref<128x8xf32, #tpu.memory_space<vmem>>, %arg2: memref<96x128xf32, #tpu.memory_space<vmem>>, %arg3: memref<8x128xf32, #tpu.memory_space<vmem>>) attributes {dimension_semantics = [#tpu.dimension_semantics<parallel>], iteration_bounds = array<i64: 1>, scalar_prefetch = 0 : i64, scratch_operands = 0 : i64, tpu.core_type = #tpu.core_type<tc>, window_params = [{transform_indices = @transform_0, window_bounds = array<i64: 128, 8>}, {pipeline_mode = #tpu.pipeline_mode<synchronous>, transform_indices = @transform_1, window_bounds = array<i64: 96, 128>}, {transform_indices = @transform_2, window_bounds = array<i64: 8, 128>}]} {
    %c0 = arith.constant 0 : index
    %c0_0 = arith.constant 0 : index
    %0 = vector.load %arg1[%c0, %c0_0] : memref<128x8xf32, #tpu.memory_space<vmem>>, vector<128x8xf32>
    %c0_1 = arith.constant 0 : index
    %c0_2 = arith.constant 0 : index
    %1 = vector.load %arg2[%c0_1, %c0_2] : memref<96x128xf32, #tpu.memory_space<vmem>>, vector<16x8xf32>
    %c16 = arith.constant 16 : index
    %c0_3 = arith.constant 0 : index
    %2 = vector.load %arg2[%c16, %c0_3] : memref<96x128xf32, #tpu.memory_space<vmem>>, vector<16x16xf32>
    %c32 = arith.constant 32 : index
    %c0_4 = arith.constant 0 : index
    %3 = vector.load %arg2[%c32, %c0_4] : memref<96x128xf32, #tpu.memory_space<vmem>>, vector<8x16xf32>
    %c48 = arith.constant 48 : index
    %c0_5 = arith.constant 0 : index
    %4 = vector.load %arg2[%c48, %c0_5] : memref<96x128xf32, #tpu.memory_space<vmem>>, vector<16x1xf32>
    %c64 = arith.constant 64 : index
    %c0_6 = arith.constant 0 : index
    %5 = vector.load %arg2[%c64, %c0_6] : memref<96x128xf32, #tpu.memory_space<vmem>>, vector<16x1xf32>
    %c80 = arith.constant 80 : index
    %c0_7 = arith.constant 0 : index
    %6 = vector.load %arg2[%c80, %c0_7] : memref<96x128xf32, #tpu.memory_space<vmem>>, vector<8x1xf32>
    %cst = arith.constant dense<0.000000e+00> : vector<16x128xf32>
    %7 = tpu.matmul %1, %0, %cst {dimension_numbers = #tpu.dot_dimension_numbers<[1], [1], [0], [0], [0, 0, 1, 0], [], []>} : vector<16x8xf32>, vector<128x8xf32>, vector<16x128xf32> -> vector<16x128xf32>
    %8 = vector.broadcast %4 : vector<16x1xf32> to vector<16x128xf32>
    %9 = arith.addf %7, %8 : vector<16x128xf32>
    %cst_8 = arith.constant 0.000000e+00 : f32
    %10 = vector.broadcast %cst_8 : f32 to vector<16x128xf32>
    %11 = arith.maximumf %9, %10 : vector<16x128xf32>
    %cst_9 = arith.constant dense<0.000000e+00> : vector<16x128xf32>
    %12 = tpu.matmul %2, %11, %cst_9 {dimension_numbers = #tpu.dot_dimension_numbers<[1], [0], [0], [1], [0, 0, 1, 1], [], []>} : vector<16x16xf32>, vector<16x128xf32>, vector<16x128xf32> -> vector<16x128xf32>
    %13 = vector.broadcast %5 : vector<16x1xf32> to vector<16x128xf32>
    %14 = arith.addf %12, %13 : vector<16x128xf32>
    %cst_10 = arith.constant 0.000000e+00 : f32
    %15 = vector.broadcast %cst_10 : f32 to vector<16x128xf32>
    %16 = arith.maximumf %14, %15 : vector<16x128xf32>
    %cst_11 = arith.constant dense<0.000000e+00> : vector<8x128xf32>
    %17 = tpu.matmul %3, %16, %cst_11 {dimension_numbers = #tpu.dot_dimension_numbers<[1], [0], [0], [1], [0, 0, 1, 1], [], []>} : vector<8x16xf32>, vector<16x128xf32>, vector<8x128xf32> -> vector<8x128xf32>
    %18 = vector.broadcast %6 : vector<8x1xf32> to vector<8x128xf32>
    %19 = arith.addf %17, %18 : vector<8x128xf32>
    %20 = tpu.iota {dimensions = array<i32: 0>} : vector<8x128xi32>
    %c1_i32 = arith.constant 1 : i32
    %21 = vector.broadcast %c1_i32 : i32 to vector<8x128xi32>
    %22 = arith.cmpi sge, %20, %21 : vector<8x128xi32>
    %c4_i32 = arith.constant 4 : i32
    %23 = vector.broadcast %c4_i32 : i32 to vector<8x128xi32>
    %24 = arith.cmpi sle, %20, %23 : vector<8x128xi32>
    %25 = arith.andi %22, %24 : vector<8x128xi1>
    %cst_12 = arith.constant -1.000000e+30 : f32
    %26 = vector.broadcast %cst_12 : f32 to vector<8x128xf32>
    %27 = arith.select %25, %19, %26 : vector<8x128xi1>, vector<8x128xf32>
    %cst_13 = arith.constant dense<0xFF800000> : vector<128xf32>
    %28 = vector.multi_reduction <maximumf>, %27, %cst_13 [0] : vector<8x128xf32> to vector<128xf32>
    %29 = vector.shape_cast %28 : vector<128xf32> to vector<1x128xf32>
    %30 = vector.broadcast %29 : vector<1x128xf32> to vector<8x128xf32>
    %31 = arith.subf %27, %30 : vector<8x128xf32>
    %32 = math.exp %31 : vector<8x128xf32>
    %cst_14 = arith.constant dense<0.000000e+00> : vector<128xf32>
    %33 = vector.multi_reduction <add>, %32, %cst_14 [0] : vector<8x128xf32> to vector<128xf32>
    %34 = vector.shape_cast %33 : vector<128xf32> to vector<1x128xf32>
    %35 = tpu.reciprocal %34 {approx = true} : vector<1x128xf32> -> vector<1x128xf32>
    %36 = arith.mulf %34, %35 : vector<1x128xf32>
    %cst_15 = arith.constant 2.000000e+00 : f32
    %37 = vector.broadcast %cst_15 : f32 to vector<1x128xf32>
    %38 = arith.subf %37, %36 : vector<1x128xf32>
    %39 = arith.mulf %35, %38 : vector<1x128xf32>
    %c0_i32 = arith.constant 0 : i32
    %40 = vector.broadcast %c0_i32 : i32 to vector<8x128xi32>
    %41 = arith.cmpi eq, %20, %40 : vector<8x128xi32>
    %42 = vector.broadcast %39 : vector<1x128xf32> to vector<8x128xf32>
    %43 = arith.mulf %32, %42 : vector<8x128xf32>
    %44 = arith.select %41, %19, %43 : vector<8x128xi1>, vector<8x128xf32>
    %c0_16 = arith.constant 0 : index
    %c0_17 = arith.constant 0 : index
    %45 = vector.load %arg3[%c0_16, %c0_17] : memref<8x128xf32, #tpu.memory_space<vmem>>, vector<8x128xf32>
    tpu.vector_store %arg3[%c0_16, %c0_17], %44 {strides = array<i32>} : memref<8x128xf32, #tpu.memory_space<vmem>>, vector<8x128xf32>,
    return
  }
  func.func @transform_0(%arg0: i32) -> (i32, i32) {
    %c0_i32 = arith.constant 0 : i32
    %c0_i32_0 = arith.constant 0 : i32
    return %arg0, %c0_i32 : i32, i32
  }
  func.func @transform_1(%arg0: i32) -> (i32, i32) {
    %c0_i32 = arith.constant 0 : i32
    %c0_i32_0 = arith.constant 0 : i32
    %c0_i32_1 = arith.constant 0 : i32
    return %c0_i32, %c0_i32_0 : i32, i32
  }
  func.func @transform_2(%arg0: i32) -> (i32, i32) {
    %c0_i32 = arith.constant 0 : i32
    %c0_i32_0 = arith.constant 0 : i32
    return %c0_i32, %arg0 : i32, i32
  }
}

</mosaic_0001>

<llo_original>
// kernel: tpu_custom_call.1
$region0: #{tpu_custom_call.1}
  #allocation0 [shape = 'u32[]', space=smem, size = 0x4, offset = 0x4, fixed_abs, tag = 'smem constant byte address 0x4 - core index']
  #allocation1 [shape = 'u32[144,128]{1,0:T(1,128)}', space=vmem, size = 0x12000, scoped, tag = 'internal scratch']
  %s0 = inlined_call_operand.vmem [shape: f32[128,8], index: 0, kind: input, shape index: {}]
  %s1 = inlined_call_operand.vmem [shape: f32[96,128], index: 1, kind: input, shape index: {}]
  %s2 = inlined_call_operand.hbm [shape: f32[8,128], index: 2, kind: output, shape index: {}]
  %s3 = sld [smem:[#allocation0]]
  $region18: #{tpu_custom_call.1} parent=0
    _
  %s5 = ssub.s32 1, %s3
  %s6 = scalar_select 0, %s5, %s3
  $region1: #{tpu_custom_call.1} parent=0
    #allocation2 [shape = 'u8[4096]{0}', space=vmem, size = 0x1000, scoped, tag = 'output window, operand 0, single buffered']
    #allocation3 [shape = 's32[1]{0}', space=sflag, size = 0x4, scoped, tag = 'scoped memory for tpu_custom_call.1']
    %7 = vsyncpa [#allocation3], 0
    // Predicated region
    $region2: #{tpu_custom_call.1} parent=1 // pred_check
      _
    $region3: #{tpu_custom_call.1} parent=1 // pred_check_branch
      %9 = sbr.rel (0) target = $region5
    $region4: #{tpu_custom_call.1} parent=1 // pred_region
      _
    $region5: #{tpu_custom_call.1} parent=1 // pred_fallthru
      _
    // Predicated region
    $region6: #{tpu_custom_call.1} parent=1 // pred_check
      _
    $region7: #{tpu_custom_call.1} parent=1 // pred_check_branch
      %11 = sbr.rel (0) target = $region9
    $region8: #{tpu_custom_call.1} parent=1 // pred_region
      _
    $region9: #{tpu_custom_call.1} parent=1 // pred_fallthru
      _
    %v12 = vld [vmem:[%s0] sm:$0xff]
    %v13 = vld [vmem:[%s0 + $0x8] sm:$0xff]
    %v14 = vld [vmem:[%s0 + $0x10] sm:$0xff]
    %v15 = vld [vmem:[%s0 + $0x18] sm:$0xff]
    %v16 = vld [vmem:[%s0 + $0x20] sm:$0xff]
    %v17 = vld [vmem:[%s0 + $0x28] sm:$0xff]
    %v18 = vld [vmem:[%s0 + $0x30] sm:$0xff]
    %v19 = vld [vmem:[%s0 + $0x38] sm:$0xff]
    %v20 = vld [vmem:[%s0 + $0x40] sm:$0xff]
    %v21 = vld [vmem:[%s0 + $0x48] sm:$0xff]
    %v22 = vld [vmem:[%s0 + $0x50] sm:$0xff]
    %v23 = vld [vmem:[%s0 + $0x58] sm:$0xff]
    %v24 = vld [vmem:[%s0 + $0x60] sm:$0xff]
    %v25 = vld [vmem:[%s0 + $0x68] sm:$0xff]
    %v26 = vld [vmem:[%s0 + $0x70] sm:$0xff]
    %v27 = vld [vmem:[%s0 + $0x78] sm:$0xff]
    %v28 = vld [vmem:[%s1] sm:$0xff]
    %v29 = vld [vmem:[%s1 + $0x8] sm:$0xff]
    %v30 = vld [vmem:[%s1 + $0x10] sm:$0xff]
    %v31 = vld [vmem:[%s1 + $0x18] sm:$0xff]
    %v32 = vld [vmem:[%s1 + $0x20] sm:$0xff]
    %v33 = vld [vmem:[%s1 + $0x30] sm:$0xff]
    %v34 = vld [vmem:[%s1 + $0x38] sm:$0xff]
    %v35 = vld [vmem:[%s1 + $0x40] sm:$0xff]
    %v36 = vld [vmem:[%s1 + $0x48] sm:$0xff]
    %v37 = vld [vmem:[%s1 + $0x50] sm:$0xff]
    %39 = vset.pattern.permute.xlu0 0
    %40 = vperm.xlu0 %39, %v33
    %v41 = vpop.permute.xlu0 %40
    %44 = vset.pattern.permute.xlu0 0
    %45 = vperm.xlu0 %44, %v34
    %v46 = vpop.permute.xlu0 %45
    %vm48 = vcmask 64512
    %v50 = vsel %vm48, %v28, 0
    %v53 = vsel %vm48, %v29, 0
    %v56 = vsel %vm48, %v12, 0
    %v59 = vsel %vm48, %v13, 0
    %v62 = vsel %vm48, %v14, 0
    %v65 = vsel %vm48, %v15, 0
    %v68 = vsel %vm48, %v16, 0
    %v71 = vsel %vm48, %v17, 0
    %v74 = vsel %vm48, %v18, 0
    %v77 = vsel %vm48, %v19, 0
    %v80 = vsel %vm48, %v20, 0
    %v83 = vsel %vm48, %v21, 0
    %v86 = vsel %vm48, %v22, 0
    %v89 = vsel %vm48, %v23, 0
    %v92 = vsel %vm48, %v24, 0
    %v95 = vsel %vm48, %v25, 0
    %v98 = vsel %vm48, %v26, 0
    %v101 = vsel %vm48, %v27, 0
    %103 = vmatprep.subr.mxu0 0.0
    %104 = vmatpush1.xpose.msra.mxu0 %v56
    %105 = vmatprep.subr.mxu0 0.0
    %106 = vmatpush1.xpose.msra.mxu0 %v59
    %107 = vmatprep.subr.mxu0 0.0
    %108 = vmatpush1.xpose.msra.mxu0 %v62
    %109 = vmatprep.subr.mxu0 0.0
    %110 = vmatpush1.xpose.msra.mxu0 %v65
    %111 = vmatprep.subr.mxu0 0.0
    %112 = vmatpush1.xpose.msra.mxu0 %v68
    %113 = vmatprep.subr.mxu0 0.0
    %114 = vmatpush1.xpose.msra.mxu0 %v71
    %115 = vmatprep.subr.mxu0 0.0
    %116 = vmatpush1.xpose.msra.mxu0 %v74
    %117 = vmatprep.subr.mxu0 0.0
    %118 = vmatpush1.xpose.msra.mxu0 %v77
    %119 = vmatprep.subr.mxu0 0.0
    %120 = vmatpush1.xpose.msra.mxu0 %v80
    %121 = vmatprep.subr.mxu0 0.0
    %122 = vmatpush1.xpose.msra.mxu0 %v83
    %123 = vmatprep.subr.mxu0 0.0
    %124 = vmatpush1.xpose.msra.mxu0 %v86
    %125 = vmatprep.subr.mxu0 0.0
    %126 = vmatpush1.xpose.msra.mxu0 %v89
    %127 = vmatprep.subr.mxu0 0.0
    %128 = vmatpush1.xpose.msra.mxu0 %v92
    %129 = vmatprep.subr.mxu0 0.0
    %130 = vmatpush1.xpose.msra.mxu0 %v95
    %131 = vmatprep.subr.mxu0 0.0
    %132 = vmatpush1.xpose.msra.mxu0 %v98
    %133 = vmatprep.subr.mxu0 0.0
    %134 = vmatpush1.xpose.msra.mxu0 %v101
    %135 = vmatprep.subr.mxu0 0.0
    %136 = vmatpush1.xpose.msra.mxu0 0.0
    %137 = vmatprep.subr.mxu0 0.0
    %138 = vmatpush1.xpose.msra.mxu0 0.0
    %139 = vmatprep.subr.mxu0 0.0
    %140 = vmatpush1.xpose.msra.mxu0 0.0
    %141 = vmatprep.subr.mxu0 0.0
    %142 = vmatpush1.xpose.msra.mxu0 0.0
    %143 = vmatprep.subr.mxu0 0.0
    %144 = vmatpush1.xpose.msra.mxu0 0.0
    %145 = vmatprep.subr.mxu0 0.0
    %146 = vmatpush1.xpose.msra.mxu0 0.0
    %147 = vmatprep.subr.mxu0 0.0
    %148 = vmatpush1.xpose.msra.mxu0 0.0
    %149 = vmatprep.subr.mxu0 0.0
    %150 = vmatpush1.xpose.msra.mxu0 0.0
    %151 = vmatprep.subr.mxu0 0.0
    %152 = vmatpush1.xpose.msra.mxu0 0.0
    %153 = vmatprep.subr.mxu0 0.0
    %154 = vmatpush1.xpose.msra.mxu0 0.0
    %155 = vmatprep.subr.mxu0 0.0
    %156 = vmatpush1.xpose.msra.mxu0 0.0
    %157 = vmatprep.subr.mxu0 0.0
    %158 = vmatpush1.xpose.msra.mxu0 0.0
    %159 = vmatprep.subr.mxu0 0.0
    %160 = vmatpush1.xpose.msra.mxu0 0.0
    %161 = vmatprep.subr.mxu0 0.0
    %162 = vmatpush1.xpose.msra.mxu0 0.0
    %163 = vmatprep.subr.mxu0 0.0
    %164 = vmatpush1.xpose.msra.mxu0 0.0
    %165 = vmatprep.subr.mxu0 0.0
    %166 = vmatpush1.xpose.msra.mxu0 0.0
    %167 = vmatprep.mubr.f32.mxu0 0.0
    %168 = vmatmul.mubr.f32.gmra.mrb[0].mxu0 %v50
    %v169 = vpop.f32.mrb[0].mxu0
    %v170 = vadd.f32 %v41, %v169
    %v171 = vpop.f32.mrb[0].mxu0
    %172 = vmatprep.mubr.f32.mxu0 0.0
    %173 = vmatmul.mubr.f32.gmra.mrb[0].mxu0 %v53
    %v174 = vpop.f32.mrb[0].mxu0
    %v175 = vadd.f32 %v46, %v174
    %v176 = vpop.f32.mrb[0].mxu0
    %177 = vdwg.mxu0
    %v178 = vmax.f32 %v170, 0.0
    %v179 = vmax.f32 %v175, 0.0
    %181 = vset.pattern.permute.xlu0 0
    %182 = vperm.xlu0 %181, %v35
    %v183 = vpop.permute.xlu0 %182
    %186 = vset.pattern.permute.xlu0 0
    %187 = vperm.xlu0 %186, %v36
    %v188 = vpop.permute.xlu0 %187
    %vm190 = vcmask 130048
    %v192 = vsel %vm190, %v30, 0
    %v195 = vsel %vm190, %v31, 0
    %197 = vmatprep.subr.mxu0 0.0
    %198 = vmatpush1.msra.mxu0 %v178
    %199 = vmatprep.subr.mxu0 0.0
    %200 = vmatpush1.msra.mxu0 %v179
    %201 = vmatprep.subr.mxu0 0.0
    %202 = vmatpush1.msra.mxu0 0.0
    %203 = vmatprep.subr.mxu0 0.0
    %204 = vmatpush1.msra.mxu0 0.0
    %205 = vmatprep.subr.mxu0 0.0
    %206 = vmatpush1.msra.mxu0 0.0
    %207 = vmatprep.subr.mxu0 0.0
    %208 = vmatpush1.msra.mxu0 0.0
    %209 = vmatprep.subr.mxu0 0.0
    %210 = vmatpush1.msra.mxu0 0.0
    %211 = vmatprep.subr.mxu0 0.0
    %212 = vmatpush1.msra.mxu0 0.0
    %213 = vmatprep.subr.mxu0 0.0
    %214 = vmatpush1.msra.mxu0 0.0
    %215 = vmatprep.subr.mxu0 0.0
    %216 = vmatpush1.msra.mxu0 0.0
    %217 = vmatprep.subr.mxu0 0.0
    %218 = vmatpush1.msra.mxu0 0.0
    %219 = vmatprep.subr.mxu0 0.0
    %220 = vmatpush1.msra.mxu0 0.0
    %221 = vmatprep.subr.mxu0 0.0
    %222 = vmatpush1.msra.mxu0 0.0
    %223 = vmatprep.subr.mxu0 0.0
    %224 = vmatpush1.msra.mxu0 0.0
    %225 = vmatprep.subr.mxu0 0.0
    %226 = vmatpush1.msra.mxu0 0.0
    %227 = vmatprep.subr.mxu0 0.0
    %228 = vmatpush1.msra.mxu0 0.0
    %229 = vmatprep.subr.mxu0 0.0
    %230 = vmatpush1.msra.mxu0 0.0
    %231 = vmatprep.subr.mxu0 0.0
    %232 = vmatpush1.msra.mxu0 0.0
    %233 = vmatprep.subr.mxu0 0.0
    %234 = vmatpush1.msra.mxu0 0.0
    %235 = vmatprep.subr.mxu0 0.0
    %236 = vmatpush1.msra.mxu0 0.0
    %237 = vmatprep.subr.mxu0 0.0
    %238 = vmatpush1.msra.mxu0 0.0
    %239 = vmatprep.subr.mxu0 0.0
    %240 = vmatpush1.msra.mxu0 0.0
    %241 = vmatprep.subr.mxu0 0.0
    %242 = vmatpush1.msra.mxu0 0.0
    %243 = vmatprep.subr.mxu0 0.0
    %244 = vmatpush1.msra.mxu0 0.0
    %245 = vmatprep.subr.mxu0 0.0
    %246 = vmatpush1.msra.mxu0 0.0
    %247 = vmatprep.subr.mxu0 0.0
    %248 = vmatpush1.msra.mxu0 0.0
    %249 = vmatprep.subr.mxu0 0.0
    %250 = vmatpush1.msra.mxu0 0.0
    %251 = vmatprep.subr.mxu0 0.0
    %252 = vmatpush1.msra.mxu0 0.0
    %253 = vmatprep.subr.mxu0 0.0
    %254 = vmatpush1.msra.mxu0 0.0
    %255 = vmatprep.subr.mxu0 0.0
    %256 = vmatpush1.msra.mxu0 0.0
    %257 = vmatprep.subr.mxu0 0.0
    %258 = vmatpush1.msra.mxu0 0.0
    %259 = vmatprep.subr.mxu0 0.0
    %260 = vmatpush1.msra.mxu0 0.0
    %261 = vmatprep.mubr.f32.mxu0 0.0
    %262 = vmatmul.mubr.f32.gmra.mrb[0].mxu0 %v192
    %v263 = vpop.f32.mrb[0].mxu0
    %v264 = vadd.f32 %v183, %v263
    %v265 = vpop.f32.mrb[0].mxu0
    %266 = vmatprep.mubr.f32.mxu0 0.0
    %267 = vmatmul.mubr.f32.gmra.mrb[0].mxu0 %v195
    %v268 = vpop.f32.mrb[0].mxu0
    %v269 = vadd.f32 %v188, %v268
    %v270 = vpop.f32.mrb[0].mxu0
    %271 = vdwg.mxu0
    %v272 = vmax.f32 %v264, 0.0
    %v273 = vmax.f32 %v269, 0.0
    %275 = vset.pattern.permute.xlu0 0
    %276 = vperm.xlu0 %275, %v37
    %v277 = vpop.permute.xlu0 %276
    %v280 = vsel %vm190, %v32, 0
    %282 = vmatprep.subr.mxu0 0.0
    %283 = vmatpush1.msra.mxu0 %v272
    %284 = vmatprep.subr.mxu0 0.0
    %285 = vmatpush1.msra.mxu0 %v273
    %286 = vmatprep.subr.mxu0 0.0
    %287 = vmatpush1.msra.mxu0 0.0
    %288 = vmatprep.subr.mxu0 0.0
    %289 = vmatpush1.msra.mxu0 0.0
    %290 = vmatprep.subr.mxu0 0.0
    %291 = vmatpush1.msra.mxu0 0.0
    %292 = vmatprep.subr.mxu0 0.0
    %293 = vmatpush1.msra.mxu0 0.0
    %294 = vmatprep.subr.mxu0 0.0
    %295 = vmatpush1.msra.mxu0 0.0
    %296 = vmatprep.subr.mxu0 0.0
    %297 = vmatpush1.msra.mxu0 0.0
    %298 = vmatprep.subr.mxu0 0.0
    %299 = vmatpush1.msra.mxu0 0.0
    %300 = vmatprep.subr.mxu0 0.0
    %301 = vmatpush1.msra.mxu0 0.0
    %302 = vmatprep.subr.mxu0 0.0
    %303 = vmatpush1.msra.mxu0 0.0
    %304 = vmatprep.subr.mxu0 0.0
    %305 = vmatpush1.msra.mxu0 0.0
    %306 = vmatprep.subr.mxu0 0.0
    %307 = vmatpush1.msra.mxu0 0.0
    %308 = vmatprep.subr.mxu0 0.0
    %309 = vmatpush1.msra.mxu0 0.0
    %310 = vmatprep.subr.mxu0 0.0
    %311 = vmatpush1.msra.mxu0 0.0
    %312 = vmatprep.subr.mxu0 0.0
    %313 = vmatpush1.msra.mxu0 0.0
    %314 = vmatprep.subr.mxu0 0.0
    %315 = vmatpush1.msra.mxu0 0.0
    %316 = vmatprep.subr.mxu0 0.0
    %317 = vmatpush1.msra.mxu0 0.0
    %318 = vmatprep.subr.mxu0 0.0
    %319 = vmatpush1.msra.mxu0 0.0
    %320 = vmatprep.subr.mxu0 0.0
    %321 = vmatpush1.msra.mxu0 0.0
    %322 = vmatprep.subr.mxu0 0.0
    %323 = vmatpush1.msra.mxu0 0.0
    %324 = vmatprep.subr.mxu0 0.0
    %325 = vmatpush1.msra.mxu0 0.0
    %326 = vmatprep.subr.mxu0 0.0
    %327 = vmatpush1.msra.mxu0 0.0
    %328 = vmatprep.subr.mxu0 0.0
    %329 = vmatpush1.msra.mxu0 0.0
    %330 = vmatprep.subr.mxu0 0.0
    %331 = vmatpush1.msra.mxu0 0.0
    %332 = vmatprep.subr.mxu0 0.0
    %333 = vmatpush1.msra.mxu0 0.0
    %334 = vmatprep.subr.mxu0 0.0
    %335 = vmatpush1.msra.mxu0 0.0
    %336 = vmatprep.subr.mxu0 0.0
    %337 = vmatpush1.msra.mxu0 0.0
    %338 = vmatprep.subr.mxu0 0.0
    %339 = vmatpush1.msra.mxu0 0.0
    %340 = vmatprep.subr.mxu0 0.0
    %341 = vmatpush1.msra.mxu0 0.0
    %342 = vmatprep.subr.mxu0 0.0
    %343 = vmatpush1.msra.mxu0 0.0
    %344 = vmatprep.subr.mxu0 0.0
    %345 = vmatpush1.msra.mxu0 0.0
    %346 = vmatprep.mubr.f32.mxu0 0.0
    %347 = vmatmul.mubr.f32.gmra.mrb[0].mxu0 %v280
    %v348 = vpop.f32.mrb[0].mxu0
    %v349 = vadd.f32 %v277, %v348
    %v350 = vpop.f32.mrb[0].mxu0
    %351 = vdwg.mxu0
    %v352 = vlaneseq
    %v353 = vshrl.u32 %v352, 7
    %vm354 = vcmp.ge.s32.totalorder %v353, 1
    %vm355 = vcmp.le.s32.totalorder %v353, 4
    %vm356 = vmand %vm354, %vm355
    %v357 = vsel %vm356, %v349, -1e+30
    %v358 = vrot.slane %v357, 4
    %v359 = vmax.f32 %v357, %v358
    %v360 = vrot.slane %v359, 2
    %v361 = vmax.f32 %v359, %v360
    %v362 = vrot.slane %v361, 1
    %v363 = vmax.f32 %v361, %v362
    %v364 = vsub.f32 %v357, %v363
    %v365 = vmul.f32 %v364, 1.442695
    %v366 = vpow.pop %v365
    %v367 = vrot.slane %v366, 4
    %v368 = vadd.f32 %v366, %v367
    %v369 = vrot.slane %v368, 2
    %v370 = vadd.f32 %v368, %v369
    %v371 = vrot.slane %v370, 1
    %v372 = vadd.f32 %v370, %v371
    %v373 = vrcp.pop %v372
    %v374 = vmul.f32 %v372, %v373
    %v375 = vsub.f32 2.0, %v374
    %v376 = vmul.f32 %v373, %v375
    %vm377 = vcmp.eq.s32.totalorder %v353, 0
    %v378 = vmul.f32 %v366, %v376
    %v379 = vsel %vm377, %v349, %v378
    %380 = vst [vmem:[#allocation2] sm:$0xff] %v379
    // Predicated region
    $region10: #{tpu_custom_call.1} parent=1 // pred_check
      _
    $region11: #{tpu_custom_call.1} parent=1 // pred_check_branch
      %382 = sbr.rel (0) target = $region13
    $region12: #{tpu_custom_call.1} parent=1 // pred_region
      %s384 = ssub.s32 128, 128
      %385 = vsyncadd [#allocation3], %s384
      %s387 = sshll.u32 [#allocation2], 4
      %s388 = int_to_ptr.vmem [resolvable:$true] %s387
      %390 = dma.vmem_to_hbm [thread:$0]  %s388, 128, %s2, [#allocation3]
    $region13: #{tpu_custom_call.1} parent=1 // pred_fallthru
      _
    // Predicated region
    $region14: #{tpu_custom_call.1} parent=1 // pred_check
      _
    $region15: #{tpu_custom_call.1} parent=1 // pred_check_branch
      %392 = sbr.rel (0) target = $region17
    $region16: #{tpu_custom_call.1} parent=1 // pred_region
      %393 = dma.done [#allocation3], 128
    $region17: #{tpu_custom_call.1} parent=1 // pred_fallthru
      _
    %394 = vsyncpa [#allocation3], 1

</llo_original>
